<compile_context>
chip_gen: v5e
topology: v5e:2x2
jax: 0.10.0
libtpu: 0.0.40
codegen_flags: <defaults>
</compile_context>

<pallas_src>
import functools

import jax
import jax.numpy as jnp
from jax.experimental import pallas as pl
from jax.experimental.pallas import tpu as pltpu

LANE = 128        # filters / feature dims are zero-padded to this lane width
BIAS_ROWS = 8     # sublane-aligned bias sub-block inside the packed parameter slab


# ----------------------------- Pallas kernel --------------------------------
def _deepconn_kernel(ids_ref, emb_ref, par_ref, out_ref):
    """Both DeepCoNN towers (user + item) in one launch (no grid).

    ids_ref : (2, L, 1)              int32    flattened token ids per tower
    emb_ref : (2, V, D)              float32  embedding tables
    par_ref : (2, D+8+FP, K*FP)      float32  packed params per tower:
                rows [0, D)          -> conv weight reshaped to (D, K*FP)
                row  D               -> conv bias  (cols [0, FP))
                row  D+1             -> fc bias    (cols [0, FEATP))
                rows [D+8, D+8+FP)   -> fc weight  (cols [0, FEATP))
    out_ref : (2, 1, FEATP)          float32
    """
    T, L, _ = ids_ref.shape
    _, V, D = emb_ref.shape
    PR, KFP = par_ref.shape[1], par_ref.shape[2]
    FP = PR - D - BIAS_ROWS          # padded filter count (== LANE)
    K = KFP // FP                    # conv kernel size (number of taps)
    FEATP = out_ref.shape[2]         # padded feature dim (== LANE)
    L_out = L - K + 1

    vocab_iota = jax.lax.broadcasted_iota(jnp.int32, (L, V), 1)
    row_iota = jax.lax.broadcasted_iota(jnp.int32, (L, FP), 0)

    for t in range(T):  # static 2-iteration loop; both towers share one launch
        # --- in-kernel embedding gather as a one-hot matmul (exact in f32) ----
        # TODO(synk): for realistic vocab sizes switch to an SMEM-prefetched DMA row
        # gather from an HBM-resident table instead of the O(L*V) one-hot matmul.
        onehot = (ids_ref[t] == vocab_iota).astype(jnp.float32)                # (L, V)
        doc = jnp.dot(onehot, emb_ref[t], preferred_element_type=jnp.float32)  # (L, D)

        # --- "valid" conv with full-width kernel as ONE MXU matmul -------------
        # taps[l, k*FP + f] = sum_d doc[l, d] * W[f, 0, k, d]; fold the K tap
        # groups with sublane rolls (XLU, cheap) + adds:
        #   conv[p, f] = sum_k taps[p + k, k*FP + f]
        taps = jnp.dot(doc, par_ref[t, 0:D, :],
                       preferred_element_type=jnp.float32)                     # (L, K*FP)
        acc = taps[:, 0:FP]
        for k in range(1, K):
            grp = taps[:, k * FP:(k + 1) * FP]                                 # (L, FP)
            # shift = L - k  ==  jnp.roll(grp, -k, axis=0): row p picks up row p+k;
            # wrapped rows land at p >= L_out and are masked below.
            acc = acc + pltpu.roll(grp, shift=L - k, axis=0)

        bias_blk = par_ref[t, D:D + BIAS_ROWS, :]                              # (8, K*FP)
        conv_b = bias_blk[0:1, 0:FP]                                           # (1, FP)
        fc_b = bias_blk[1:2, 0:FEATP]                                          # (1, FEATP)

        # bias + ReLU; rows >= L_out hold wrapped garbage -> mask with 0.0
        # (safe: post-ReLU values are >= 0, so extra zeros never win the max).
        h = jnp.where(row_iota < L_out,
                      jnp.maximum(acc + conv_b, 0.0), 0.0)                     # (L, FP)
        pooled = jnp.max(h, axis=0, keepdims=True)                             # (1, FP)

        # fully connected layer (dropout is identity in eval mode)
        fw = par_ref[t, D + BIAS_ROWS:D + BIAS_ROWS + FP, 0:FEATP]             # (FP, FEATP)
        out_ref[t] = (jnp.dot(pooled, fw, preferred_element_type=jnp.float32)
                      + fc_b)                                                  # (1, FEATP)


def deepconn_towers(ids, emb, params_packed):
    """Fused user+item towers, single gridless launch.

    ids           : (2, L, 1)            int32
    emb           : (2, V, D)            f32
    params_packed : (2, D+8+128, K*128)  f32
    returns         (2, 1, 128)          f32   (lane-padded features; slice outside)
    """
    feat_pad = params_packed.shape[1] - emb.shape[2] - BIAS_ROWS
    return pl.pallas_call(
        _deepconn_kernel,
        out_shape=jax.ShapeDtypeStruct((ids.shape[0], 1, feat_pad), jnp.float32),
        in_specs=[
            pl.BlockSpec(memory_space=pltpu.MemorySpace.VMEM),
            pl.BlockSpec(memory_space=pltpu.MemorySpace.VMEM),
            pl.BlockSpec(memory_space=pltpu.MemorySpace.VMEM),
        ],
        out_specs=pl.BlockSpec(memory_space=pltpu.MemorySpace.VMEM),
    )(ids, emb, params_packed)


# ------------------------ one-time parameter preparation ---------------------
def prepare_deepconn_params(params):
    """Pack user/item params into the kernel layout ONCE (outside the hot path)."""

    def pack_side(conv_w, conv_b, fc_w, fc_b):
        F, _, K, D = conv_w.shape              # torch Conv2d weight (F, 1, K, D)
        FEAT = fc_w.shape[0]                   # torch Linear weight (FEAT, F)
        assert F <= LANE and FEAT <= LANE and D % 8 == 0
        FP = LANE
        KFP = K * FP
        w = jnp.transpose(conv_w[:, 0, :, :], (1, 2, 0))               # (K, D, F)
        w = jnp.pad(w, ((0, 0), (0, 0), (0, FP - F)))                  # (K, D, FP)
        cw2d = jnp.transpose(w, (1, 0, 2)).reshape(D, KFP)             # (D, K*FP)
        cb_row = jnp.pad(conv_b, (0, KFP - F))[None, :]                # (1, KFP)
        fb_row = jnp.pad(fc_b, (0, KFP - FEAT))[None, :]               # (1, KFP)
        bias_blk = jnp.concatenate(
            [cb_row, fb_row, jnp.zeros((BIAS_ROWS - 2, KFP), jnp.float32)], axis=0)
        fw = jnp.pad(fc_w.T, ((0, FP - F), (0, KFP - FEAT)))           # (FP, KFP)
        return jnp.concatenate([cw2d, bias_blk, fw], axis=0)           # (D+8+FP, K*FP)

    emb = jnp.stack([params["user_emb"], params["item_emb"]], axis=0).astype(jnp.float32)
    packed = jnp.stack(
        [pack_side(params["user_conv_w"], params["user_conv_b"],
                   params["user_fc_w"], params["user_fc_b"]),
         pack_side(params["item_conv_w"], params["item_conv_b"],
                   params["item_fc_w"], params["item_fc_b"])], axis=0).astype(jnp.float32)
    return {"emb": emb, "params": packed}


# ------------------------------ full forward --------------------------------
@functools.partial(jax.jit, static_argnames=("feature_dim",))
def deepconn_forward(prepared, user_all_summary, item_all_summary, *, feature_dim):
    """user_all_summary / item_all_summary: (n_summaries, summary_len) int32 token ids."""
    n, s = user_all_summary.shape
    L = n * s
    ids = jnp.stack(
        [user_all_summary.reshape(L), item_all_summary.reshape(L)], axis=0
    ).astype(jnp.int32)[:, :, None]                                     # (2, L, 1)
    fea = deepconn_towers(ids, prepared["emb"], prepared["params"])     # (2, 1, FEATP)
    fea = fea[:, :, :feature_dim]                                       # drop lane padding
    # torch.stack([fea], dim=1) -> (1, 1, feature_dim) per side
    return fea[0:1], fea[1:2]


# pure-JAX reference for sanity checking (mirrors the PyTorch module)
def _reference_tower(doc, conv_w, conv_b, fc_w, fc_b):
    K = conv_w.shape[2]
    L = doc.shape[0]
    L_out = L - K + 1
    w = conv_w[:, 0, :, :]                                                 # (F, K, D)
    patches = jnp.stack([doc[k:k + L_out] for k in range(K)], axis=1)      # (L_out, K, D)
    conv = jnp.einsum("lkd,fkd->lf", patches, w) + conv_b[None, :]
    h = jnp.maximum(conv, 0.0)
    pooled = jnp.max(h, axis=0)                                            # (F,)
    return pooled @ fc_w.T + fc_b                                          # (FEAT,)


# ----------------------------------- main ------------------------------------
if __name__ == "__main__":
    # small config consistent with the module
    vocab_size = 100
    word_dim = 32           # == summary_dim so conv output width is 1 (as the model assumes)
    summary_dim = 32
    kernel_size = 3
    filters_num = 16
    feature_dim = 8
    n_summaries = 4
    summary_len = 8

    key = jax.random.PRNGKey(0)
    keys = jax.random.split(key, 12)

    def xavier_normal(k, shape):
        fan_in = shape[1] * shape[2] * shape[3]
        fan_out = shape[0] * shape[2] * shape[3]
        std = (2.0 / (fan_in + fan_out)) ** 0.5
        return std * jax.random.normal(k, shape, jnp.float32)

    params = {
        "user_emb": jax.random.uniform(keys[0], (vocab_size, word_dim), jnp.float32, -0.1, 0.1),
        "item_emb": jax.random.uniform(keys[1], (vocab_size, word_dim), jnp.float32, -0.1, 0.1),
        # Conv2d weight shape (out_ch, in_ch, kH, kW) = (filters, 1, kernel_size, summary_dim)
        "user_conv_w": xavier_normal(keys[2], (filters_num, 1, kernel_size, summary_dim)),
        "item_conv_w": xavier_normal(keys[3], (filters_num, 1, kernel_size, summary_dim)),
        "user_conv_b": jnp.full((filters_num,), 0.1, jnp.float32),
        "item_conv_b": jnp.full((filters_num,), 0.1, jnp.float32),
        "user_fc_w": jax.random.uniform(keys[4], (feature_dim, filters_num), jnp.float32, -0.1, 0.1),
        "item_fc_w": jax.random.uniform(keys[5], (feature_dim, filters_num), jnp.float32, -0.1, 0.1),
        "user_fc_b": jnp.full((feature_dim,), 0.1, jnp.float32),
        "item_fc_b": jnp.full((feature_dim,), 0.1, jnp.float32),
    }

    user_all_summary = jax.random.randint(keys[6], (n_summaries, summary_len), 0, vocab_size, jnp.int32)
    item_all_summary = jax.random.randint(keys[7], (n_summaries, summary_len), 0, vocab_size, jnp.int32)

    prepared = prepare_deepconn_params(params)          # one-time layout prep (outside hot path)

    u_fea, i_fea = deepconn_forward(prepared, user_all_summary, item_all_summary,
                                    feature_dim=feature_dim)
    u_fea = jax.block_until_ready(u_fea)
    i_fea = jax.block_until_ready(i_fea)

    assert u_fea.shape == (1, 1, feature_dim)
    assert i_fea.shape == (1, 1, feature_dim)

    # correctness check against a pure-JAX reference
    u_doc = jnp.take(params["user_emb"], user_all_summary.reshape(-1), axis=0)
    i_doc = jnp.take(params["item_emb"], item_all_summary.reshape(-1), axis=0)
    u_ref = _reference_tower(u_doc, params["user_conv_w"], params["user_conv_b"],
                             params["user_fc_w"], params["user_fc_b"])
    i_ref = _reference_tower(i_doc, params["item_conv_w"], params["item_conv_b"],
                             params["item_fc_w"], params["item_fc_b"])
    assert jnp.allclose(u_fea[0, 0], u_ref, atol=1e-4, rtol=1e-4)
    assert jnp.allclose(i_fea[0, 0], i_ref, atol=1e-4, rtol=1e-4)

    print("KERNEL_OK")
</pallas_src>

<mosaic_0001>
module attributes {stable_mosaic.version = 11 : i64} {
  func.func @_deepconn_kernel(%arg0: memref<2x32x1xi32, #tpu.memory_space<vmem>>, %arg1: memref<2x100x32xf32, #tpu.memory_space<vmem>>, %arg2: memref<2x168x384xf32, #tpu.memory_space<vmem>>, %arg3: memref<2x1x128xf32, #tpu.memory_space<vmem>>) attributes {dimension_semantics = [], scalar_prefetch = 0 : i64, scratch_operands = 0 : i64, tpu.core_type = #tpu.core_type<tc>} {
    %0 = tpu.iota {dimensions = array<i32: 1>} : vector<32x100xi32>
    %1 = tpu.iota {dimensions = array<i32: 0>} : vector<32x128xi32>
    %c0 = arith.constant 0 : index
    %c0_0 = arith.constant 0 : index
    %c0_1 = arith.constant 0 : index
    %2 = vector.load %arg0[%c0, %c0_0, %c0_1] : memref<2x32x1xi32, #tpu.memory_space<vmem>>, vector<1x32x1xi32>
    %3 = vector.shape_cast %2 : vector<1x32x1xi32> to vector<32x1xi32>
    %4 = vector.broadcast %3 : vector<32x1xi32> to vector<32x100xi32>
    %5 = arith.cmpi eq, %4, %0 : vector<32x100xi32>
    %6 = arith.extui %5 : vector<32x100xi1> to vector<32x100xi32>
    %7 = arith.sitofp %6 : vector<32x100xi32> to vector<32x100xf32>
    %c0_2 = arith.constant 0 : index
    %c0_3 = arith.constant 0 : index
    %c0_4 = arith.constant 0 : index
    %8 = vector.load %arg1[%c0_2, %c0_3, %c0_4] : memref<2x100x32xf32, #tpu.memory_space<vmem>>, vector<1x100x32xf32>
    %9 = vector.shape_cast %8 : vector<1x100x32xf32> to vector<100x32xf32>
    %cst = arith.constant dense<0.000000e+00> : vector<32x32xf32>
    %10 = tpu.matmul %7, %9, %cst {dimension_numbers = #tpu.dot_dimension_numbers<[1], [0], [0], [1], [0, 0, 1, 1], [], []>} : vector<32x100xf32>, vector<100x32xf32>, vector<32x32xf32> -> vector<32x32xf32>
    %c0_5 = arith.constant 0 : index
    %c0_6 = arith.constant 0 : index
    %c0_7 = arith.constant 0 : index
    %11 = vector.load %arg2[%c0_5, %c0_6, %c0_7] : memref<2x168x384xf32, #tpu.memory_space<vmem>>, vector<1x32x384xf32>
    %12 = vector.shape_cast %11 : vector<1x32x384xf32> to vector<32x384xf32>
    %cst_8 = arith.constant dense<0.000000e+00> : vector<32x384xf32>
    %13 = tpu.matmul %10, %12, %cst_8 {dimension_numbers = #tpu.dot_dimension_numbers<[1], [0], [0], [1], [0, 0, 1, 1], [], []>} : vector<32x32xf32>, vector<32x384xf32>, vector<32x384xf32> -> vector<32x384xf32>
    %14 = vector.extract_strided_slice %13 {offsets = [0, 0], sizes = [32, 128], strides = [1, 1]} : vector<32x384xf32> to vector<32x128xf32>
    %15 = vector.extract_strided_slice %13 {offsets = [0, 128], sizes = [32, 128], strides = [1, 1]} : vector<32x384xf32> to vector<32x128xf32>
    %c31_i32 = arith.constant 31 : i32
    %16 = tpu.dynamic_rotate %15 by %c31_i32 dim 0 : vector<32x128xf32>, i32 -> vector<32x128xf32>
    %17 = arith.addf %14, %16 : vector<32x128xf32>
    %18 = vector.extract_strided_slice %13 {offsets = [0, 256], sizes = [32, 128], strides = [1, 1]} : vector<32x384xf32> to vector<32x128xf32>
    %c30_i32 = arith.constant 30 : i32
    %19 = tpu.dynamic_rotate %18 by %c30_i32 dim 0 : vector<32x128xf32>, i32 -> vector<32x128xf32>
    %20 = arith.addf %17, %19 : vector<32x128xf32>
    %c0_9 = arith.constant 0 : index
    %c32 = arith.constant 32 : index
    %c0_10 = arith.constant 0 : index
    %21 = vector.load %arg2[%c0_9, %c32, %c0_10] : memref<2x168x384xf32, #tpu.memory_space<vmem>>, vector<1x8x384xf32>
    %22 = vector.shape_cast %21 : vector<1x8x384xf32> to vector<8x384xf32>
    %23 = vector.extract_strided_slice %22 {offsets = [0, 0], sizes = [1, 128], strides = [1, 1]} : vector<8x384xf32> to vector<1x128xf32>
    %24 = vector.extract_strided_slice %22 {offsets = [1, 0], sizes = [1, 128], strides = [1, 1]} : vector<8x384xf32> to vector<1x128xf32>
    %c30_i32_11 = arith.constant 30 : i32
    %25 = vector.broadcast %c30_i32_11 : i32 to vector<32x128xi32>
    %26 = arith.cmpi slt, %1, %25 : vector<32x128xi32>
    %27 = vector.broadcast %23 : vector<1x128xf32> to vector<32x128xf32>
    %28 = arith.addf %20, %27 : vector<32x128xf32>
    %cst_12 = arith.constant 0.000000e+00 : f32
    %29 = vector.broadcast %cst_12 : f32 to vector<32x128xf32>
    %30 = arith.maximumf %28, %29 : vector<32x128xf32>
    %cst_13 = arith.constant 0.000000e+00 : f32
    %31 = vector.broadcast %cst_13 : f32 to vector<32x128xf32>
    %32 = arith.select %26, %30, %31 : vector<32x128xi1>, vector<32x128xf32>
    %cst_14 = arith.constant dense<0xFF800000> : vector<128xf32>
    %33 = vector.multi_reduction <maximumf>, %32, %cst_14 [0] : vector<32x128xf32> to vector<128xf32>
    %34 = vector.shape_cast %33 : vector<128xf32> to vector<1x128xf32>
    %c0_15 = arith.constant 0 : index
    %c40 = arith.constant 40 : index
    %c0_16 = arith.constant 0 : index
    %35 = vector.load %arg2[%c0_15, %c40, %c0_16] : memref<2x168x384xf32, #tpu.memory_space<vmem>>, vector<1x128x128xf32>
    %36 = vector.shape_cast %35 : vector<1x128x128xf32> to vector<128x128xf32>
    %cst_17 = arith.constant dense<0.000000e+00> : vector<1x128xf32>
    %37 = tpu.matmul %34, %36, %cst_17 {dimension_numbers = #tpu.dot_dimension_numbers<[1], [0], [0], [1], [0, 0, 1, 1], [], []>} : vector<1x128xf32>, vector<128x128xf32>, vector<1x128xf32> -> vector<1x128xf32>
    %38 = arith.addf %37, %24 : vector<1x128xf32>
    %c0_18 = arith.constant 0 : index
    %c0_19 = arith.constant 0 : index
    %c0_20 = arith.constant 0 : index
    %39 = vector.load %arg3[%c0_18, %c0_19, %c0_20] : memref<2x1x128xf32, #tpu.memory_space<vmem>>, vector<1x1x128xf32>
    %40 = vector.shape_cast %39 : vector<1x1x128xf32> to vector<1x128xf32>
    %41 = vector.shape_cast %38 : vector<1x128xf32> to vector<1x1x128xf32>
    tpu.vector_store %arg3[%c0_18, %c0_19, %c0_20], %41 {strides = array<i32>} : memref<2x1x128xf32, #tpu.memory_space<vmem>>, vector<1x1x128xf32>,
    %c1 = arith.constant 1 : index
    %c0_21 = arith.constant 0 : index
    %c0_22 = arith.constant 0 : index
    %42 = vector.load %arg0[%c1, %c0_21, %c0_22] : memref<2x32x1xi32, #tpu.memory_space<vmem>>, vector<1x32x1xi32>
    %43 = vector.shape_cast %42 : vector<1x32x1xi32> to vector<32x1xi32>
    %44 = vector.broadcast %43 : vector<32x1xi32> to vector<32x100xi32>
    %45 = arith.cmpi eq, %44, %0 : vector<32x100xi32>
    %46 = arith.extui %45 : vector<32x100xi1> to vector<32x100xi32>
    %47 = arith.sitofp %46 : vector<32x100xi32> to vector<32x100xf32>
    %c1_23 = arith.constant 1 : index
    %c0_24 = arith.constant 0 : index
    %c0_25 = arith.constant 0 : index
    %48 = vector.load %arg1[%c1_23, %c0_24, %c0_25] : memref<2x100x32xf32, #tpu.memory_space<vmem>>, vector<1x100x32xf32>
    %49 = vector.shape_cast %48 : vector<1x100x32xf32> to vector<100x32xf32>
    %cst_26 = arith.constant dense<0.000000e+00> : vector<32x32xf32>
    %50 = tpu.matmul %47, %49, %cst_26 {dimension_numbers = #tpu.dot_dimension_numbers<[1], [0], [0], [1], [0, 0, 1, 1], [], []>} : vector<32x100xf32>, vector<100x32xf32>, vector<32x32xf32> -> vector<32x32xf32>
    %c1_27 = arith.constant 1 : index
    %c0_28 = arith.constant 0 : index
    %c0_29 = arith.constant 0 : index
    %51 = vector.load %arg2[%c1_27, %c0_28, %c0_29] : memref<2x168x384xf32, #tpu.memory_space<vmem>>, vector<1x32x384xf32>
    %52 = vector.shape_cast %51 : vector<1x32x384xf32> to vector<32x384xf32>
    %cst_30 = arith.constant dense<0.000000e+00> : vector<32x384xf32>
    %53 = tpu.matmul %50, %52, %cst_30 {dimension_numbers = #tpu.dot_dimension_numbers<[1], [0], [0], [1], [0, 0, 1, 1], [], []>} : vector<32x32xf32>, vector<32x384xf32>, vector<32x384xf32> -> vector<32x384xf32>
    %54 = vector.extract_strided_slice %53 {offsets = [0, 0], sizes = [32, 128], strides = [1, 1]} : vector<32x384xf32> to vector<32x128xf32>
    %55 = vector.extract_strided_slice %53 {offsets = [0, 128], sizes = [32, 128], strides = [1, 1]} : vector<32x384xf32> to vector<32x128xf32>
    %c31_i32_31 = arith.constant 31 : i32
    %56 = tpu.dynamic_rotate %55 by %c31_i32_31 dim 0 : vector<32x128xf32>, i32 -> vector<32x128xf32>
    %57 = arith.addf %54, %56 : vector<32x128xf32>
    %58 = vector.extract_strided_slice %53 {offsets = [0, 256], sizes = [32, 128], strides = [1, 1]} : vector<32x384xf32> to vector<32x128xf32>
    %c30_i32_32 = arith.constant 30 : i32
    %59 = tpu.dynamic_rotate %58 by %c30_i32_32 dim 0 : vector<32x128xf32>, i32 -> vector<32x128xf32>
    %60 = arith.addf %57, %59 : vector<32x128xf32>
    %c1_33 = arith.constant 1 : index
    %c32_34 = arith.constant 32 : index
    %c0_35 = arith.constant 0 : index
    %61 = vector.load %arg2[%c1_33, %c32_34, %c0_35] : memref<2x168x384xf32, #tpu.memory_space<vmem>>, vector<1x8x384xf32>
    %62 = vector.shape_cast %61 : vector<1x8x384xf32> to vector<8x384xf32>
    %63 = vector.extract_strided_slice %62 {offsets = [0, 0], sizes = [1, 128], strides = [1, 1]} : vector<8x384xf32> to vector<1x128xf32>
    %64 = vector.extract_strided_slice %62 {offsets = [1, 0], sizes = [1, 128], strides = [1, 1]} : vector<8x384xf32> to vector<1x128xf32>
    %c30_i32_36 = arith.constant 30 : i32
    %65 = vector.broadcast %c30_i32_36 : i32 to vector<32x128xi32>
    %66 = arith.cmpi slt, %1, %65 : vector<32x128xi32>
    %67 = vector.broadcast %63 : vector<1x128xf32> to vector<32x128xf32>
    %68 = arith.addf %60, %67 : vector<32x128xf32>
    %cst_37 = arith.constant 0.000000e+00 : f32
    %69 = vector.broadcast %cst_37 : f32 to vector<32x128xf32>
    %70 = arith.maximumf %68, %69 : vector<32x128xf32>
    %cst_38 = arith.constant 0.000000e+00 : f32
    %71 = vector.broadcast %cst_38 : f32 to vector<32x128xf32>
    %72 = arith.select %66, %70, %71 : vector<32x128xi1>, vector<32x128xf32>
    %cst_39 = arith.constant dense<0xFF800000> : vector<128xf32>
    %73 = vector.multi_reduction <maximumf>, %72, %cst_39 [0] : vector<32x128xf32> to vector<128xf32>
    %74 = vector.shape_cast %73 : vector<128xf32> to vector<1x128xf32>
    %c1_40 = arith.constant 1 : index
    %c40_41 = arith.constant 40 : index
    %c0_42 = arith.constant 0 : index
    %75 = vector.load %arg2[%c1_40, %c40_41, %c0_42] : memref<2x168x384xf32, #tpu.memory_space<vmem>>, vector<1x128x128xf32>
    %76 = vector.shape_cast %75 : vector<1x128x128xf32> to vector<128x128xf32>
    %cst_43 = arith.constant dense<0.000000e+00> : vector<1x128xf32>
    %77 = tpu.matmul %74, %76, %cst_43 {dimension_numbers = #tpu.dot_dimension_numbers<[1], [0], [0], [1], [0, 0, 1, 1], [], []>} : vector<1x128xf32>, vector<128x128xf32>, vector<1x128xf32> -> vector<1x128xf32>
    %78 = arith.addf %77, %64 : vector<1x128xf32>
    %c1_44 = arith.constant 1 : index
    %c0_45 = arith.constant 0 : index
    %c0_46 = arith.constant 0 : index
    %79 = vector.load %arg3[%c1_44, %c0_45, %c0_46] : memref<2x1x128xf32, #tpu.memory_space<vmem>>, vector<1x1x128xf32>
    %80 = vector.shape_cast %79 : vector<1x1x128xf32> to vector<1x128xf32>
    %81 = vector.shape_cast %78 : vector<1x128xf32> to vector<1x1x128xf32>
    tpu.vector_store %arg3[%c1_44, %c0_45, %c0_46], %81 {strides = array<i32>} : memref<2x1x128xf32, #tpu.memory_space<vmem>>, vector<1x1x128xf32>,
    return
  }
}

</mosaic_0001>

<llo_original>
// kernel: deepconn_forward.1
$region0: #{deepconn_forward.1}
  #allocation0 [shape = 'u32[]', space=smem, size = 0x4, offset = 0x4, fixed_abs, tag = 'smem constant byte address 0x4 - core index']
  #allocation1 [shape = 'u32[72,128]{1,0:T(1,128)}', space=vmem, size = 0x9000, scoped, tag = 'internal scratch']
  %s0 = inlined_call_operand.vmem [shape: s32[2,32,1], index: 0, kind: input, shape index: {}]
  %s1 = inlined_call_operand.vmem [shape: f32[2,100,32], index: 1, kind: input, shape index: {}]
  %s2 = inlined_call_operand.hbm [shape: f32[2,168,384], index: 2, kind: input, shape index: {}]
  %s3 = inlined_call_operand.vmem [shape: f32[2,1,128], index: 3, kind: output, shape index: {}]
  %s4 = sld [smem:[#allocation0]]
  $region26: #{deepconn_forward.1} parent=0
    _
  %s6 = ssub.s32 1, %s4
  %s7 = scalar_select 0, %s6, %s4
  $region1: #{deepconn_forward.1} parent=0
    #allocation2 [shape = 'u8[516096]{0}', space=vmem, size = 0x7e000, scoped, tag = 'input window, operand 2, single buffered']
    #allocation3 [shape = 's32[1]{0}', space=sflag, size = 0x4, scoped, tag = 'scoped memory for deepconn_forward.1']
    %8 = vsyncpa [#allocation3], 0
    // Predicated region
    $region2: #{deepconn_forward.1} parent=1 // pred_check
      _
    $region3: #{deepconn_forward.1} parent=1 // pred_check_branch
      %10 = sbr.rel (0) target = $region5
    $region4: #{deepconn_forward.1} parent=1 // pred_region
      _
    $region5: #{deepconn_forward.1} parent=1 // pred_fallthru
      _
    // Predicated region
    $region6: #{deepconn_forward.1} parent=1 // pred_check
      _
    $region7: #{deepconn_forward.1} parent=1 // pred_check_branch
      %12 = sbr.rel (0) target = $region9
    $region8: #{deepconn_forward.1} parent=1 // pred_region
      _
    $region9: #{deepconn_forward.1} parent=1 // pred_fallthru
      _
    // Predicated region
    $region10: #{deepconn_forward.1} parent=1 // pred_check
      _
    $region11: #{deepconn_forward.1} parent=1 // pred_check_branch
      %14 = sbr.rel (0) target = $region13
    $region12: #{deepconn_forward.1} parent=1 // pred_region
      %16 = vsyncadd [#allocation3], 0
      %s17 = sshll.u32 %s2, 4
      %s18 = int_to_ptr.hbm [resolvable:$true] %s17
      %s19 = sshll.u32 [#allocation2], 4
      %s20 = int_to_ptr.vmem [resolvable:$true] %s19
      %25 = dma.hbm_to_vmem [thread:$0]  %s18, 16128, %s20, [#allocation3], 384, 384, 24
    $region13: #{deepconn_forward.1} parent=1 // pred_fallthru
      _
    // Predicated region
    $region14: #{deepconn_forward.1} parent=1 // pred_check
      _
    $region15: #{deepconn_forward.1} parent=1 // pred_check_branch
      %27 = sbr.rel (0) target = $region17
    $region16: #{deepconn_forward.1} parent=1 // pred_region
      %29 = dma.done [#allocation3], 16128
    $region17: #{deepconn_forward.1} parent=1 // pred_fallthru
      _
    %v30 = vlaneseq
    %v31 = vand.u32 %v30, 127
    %v32 = vlaneseq
    %v33 = vshrl.u32 %v32, 7
    %v34 = vadd.s32 %v33, 8
    %v35 = vadd.s32 %v33, 16
    %v36 = vadd.s32 %v33, 24
    %v37 = vld [vmem:[%s0] sm:$0xff]
    %v38 = vld [vmem:[%s0 + $0x8] sm:$0xff]
    %v39 = vld [vmem:[%s0 + $0x10] sm:$0xff]
    %v40 = vld [vmem:[%s0 + $0x18] sm:$0xff]
    %41 = vset.pattern.permute.xlu0 0
    %42 = vperm.xlu0 %41, %v37
    %v43 = vpop.permute.xlu0 %42
    %44 = vset.pattern.permute.xlu0 0
    %45 = vperm.xlu0 %44, %v38
    %v46 = vpop.permute.xlu0 %45
    %47 = vset.pattern.permute.xlu0 0
    %48 = vperm.xlu0 %47, %v39
    %v49 = vpop.permute.xlu0 %48
    %50 = vset.pattern.permute.xlu0 0
    %51 = vperm.xlu0 %50, %v40
    %v52 = vpop.permute.xlu0 %51
    %vm53 = vcmp.eq.s32.totalorder %v43, %v31
    %vm54 = vcmp.eq.s32.totalorder %v46, %v31
    %vm55 = vcmp.eq.s32.totalorder %v49, %v31
    %vm56 = vcmp.eq.s32.totalorder %v52, %v31
    %v57 = vsel %vm53, 1, 0
    %v58 = vsel %vm54, 1, 0
    %v59 = vsel %vm55, 1, 0
    %v60 = vsel %vm56, 1, 0
    %v61 = vcvt.s32.f32 %v57
    %v62 = vcvt.s32.f32 %v58
    %v63 = vcvt.s32.f32 %v59
    %v64 = vcvt.s32.f32 %v60
    %v65 = vld [vmem:[%s1] sm:$0xff]
    %v66 = vld [vmem:[%s1 + $0x8] sm:$0xff]
    %v67 = vld [vmem:[%s1 + $0x10] sm:$0xff]
    %v68 = vld [vmem:[%s1 + $0x18] sm:$0xff]
    %v69 = vld [vmem:[%s1 + $0x20] sm:$0xff]
    %v70 = vld [vmem:[%s1 + $0x28] sm:$0xff]
    %v71 = vld [vmem:[%s1 + $0x30] sm:$0xff]
    %v72 = vld [vmem:[%s1 + $0x38] sm:$0xff]
    %v73 = vld [vmem:[%s1 + $0x40] sm:$0xff]
    %v74 = vld [vmem:[%s1 + $0x48] sm:$0xff]
    %v75 = vld [vmem:[%s1 + $0x50] sm:$0xff]
    %v76 = vld [vmem:[%s1 + $0x58] sm:$0xff]
    %v77 = vld [vmem:[%s1 + $0x60] sm:$0xf]
    %vm78 = vcmask 818176
    %v80 = vsel %vm78, %v61, 0
    %v83 = vsel %vm78, %v62, 0
    %v86 = vsel %vm78, %v63, 0
    %v89 = vsel %vm78, %v64, 0
    %vm91 = vcmask 1043456
    %v93 = vsel %vm91, %v77, 0
    %95 = vmatpush.msra.mxu0 0.0
    %96 = vmatpush.msra.mxu0 0.0
    %97 = vmatpush.msra.mxu0 0.0
    %98 = vmatpush.msra.mxu0 %v93
    %99 = vmatpush.msra.mxu0 %v76
    %100 = vmatpush.msra.mxu0 %v75
    %101 = vmatpush.msra.mxu0 %v74
    %102 = vmatpush.msra.mxu0 %v73
    %103 = vmatpush.msra.mxu0 %v72
    %104 = vmatpush.msra.mxu0 %v71
    %105 = vmatpush.msra.mxu0 %v70
    %106 = vmatpush.msra.mxu0 %v69
    %107 = vmatpush.msra.mxu0 %v68
    %108 = vmatpush.msra.mxu0 %v67
    %109 = vmatpush.msra.mxu0 %v66
    %110 = vmatpush.msra.mxu0 %v65
    %111 = vmatmul.f32.gmra.mxu0 %v80
    %v112 = vpop.f32.mrf.mxu0
    %v113 = vadd.f32 0.0, %v112
    %114 = vmatmul.f32.gmra.mxu0 %v83
    %v115 = vpop.f32.mrf.mxu0
    %v116 = vadd.f32 0.0, %v115
    %117 = vmatmul.f32.gmra.mxu0 %v86
    %v118 = vpop.f32.mrf.mxu0
    %v119 = vadd.f32 0.0, %v118
    %120 = vmatmul.f32.gmra.mxu0 %v89
    %v121 = vpop.f32.mrf.mxu0
    %v122 = vadd.f32 0.0, %v121
    %123 = vdwg.mxu0
    %v124 = vld [vmem:[#allocation2] sm:$0xff]
    %v125 = vld [vmem:[#allocation2 + $0x8] sm:$0xff]
    %v126 = vld [vmem:[#allocation2 + $0x10] sm:$0xff]
    %v127 = vld [vmem:[#allocation2 + $0x18] sm:$0xff]
    %v128 = vld [vmem:[#allocation2 + $0x20] sm:$0xff]
    %v129 = vld [vmem:[#allocation2 + $0x28] sm:$0xff]
    %v130 = vld [vmem:[#allocation2 + $0x30] sm:$0xff]
    %v131 = vld [vmem:[#allocation2 + $0x38] sm:$0xff]
    %v132 = vld [vmem:[#allocation2 + $0x40] sm:$0xff]
    %v133 = vld [vmem:[#allocation2 + $0x48] sm:$0xff]
    %v134 = vld [vmem:[#allocation2 + $0x50] sm:$0xff]
    %v135 = vld [vmem:[#allocation2 + $0x58] sm:$0xff]
    %vm136 = vcmask 261120
    %v138 = vsel %vm136, %v113, 0
    %v141 = vsel %vm136, %v116, 0
    %v144 = vsel %vm136, %v119, 0
    %v147 = vsel %vm136, %v122, 0
    %149 = vmatpush.msra.mxu0 0.0
    %150 = vmatpush.msra.mxu0 0.0
    %151 = vmatpush.msra.mxu0 0.0
    %152 = vmatpush.msra.mxu0 0.0
    %153 = vmatpush.msra.mxu0 0.0
    %154 = vmatpush.msra.mxu0 0.0
    %155 = vmatpush.msra.mxu0 0.0
    %156 = vmatpush.msra.mxu0 0.0
    %157 = vmatpush.msra.mxu0 0.0
    %158 = vmatpush.msra.mxu0 0.0
    %159 = vmatpush.msra.mxu0 0.0
    %160 = vmatpush.msra.mxu0 0.0
    %161 = vmatpush.msra.mxu0 %v133
    %162 = vmatpush.msra.mxu0 %v130
    %163 = vmatpush.msra.mxu0 %v127
    %164 = vmatpush.msra.mxu0 %v124
    %165 = vmatmul.f32.gmra.mxu0 %v138
    %v166 = vpop.f32.mrf.mxu0
    %v167 = vadd.f32 0.0, %v166
    %168 = vmatmul.f32.gmra.mxu0 %v141
    %v169 = vpop.f32.mrf.mxu0
    %v170 = vadd.f32 0.0, %v169
    %171 = vmatmul.f32.gmra.mxu0 %v144
    %v172 = vpop.f32.mrf.mxu0
    %v173 = vadd.f32 0.0, %v172
    %174 = vmatmul.f32.gmra.mxu0 %v147
    %v175 = vpop.f32.mrf.mxu0
    %v176 = vadd.f32 0.0, %v175
    %177 = vdwg.mxu0
    %178 = vmatpush.msra.mxu0 0.0
    %179 = vmatpush.msra.mxu0 0.0
    %180 = vmatpush.msra.mxu0 0.0
    %181 = vmatpush.msra.mxu0 0.0
    %182 = vmatpush.msra.mxu0 0.0
    %183 = vmatpush.msra.mxu0 0.0
    %184 = vmatpush.msra.mxu0 0.0
    %185 = vmatpush.msra.mxu0 0.0
    %186 = vmatpush.msra.mxu0 0.0
    %187 = vmatpush.msra.mxu0 0.0
    %188 = vmatpush.msra.mxu0 0.0
    %189 = vmatpush.msra.mxu0 0.0
    %190 = vmatpush.msra.mxu0 %v134
    %191 = vmatpush.msra.mxu0 %v131
    %192 = vmatpush.msra.mxu0 %v128
    %193 = vmatpush.msra.mxu0 %v125
    %194 = vmatmul.f32.gmra.mxu0 %v138
    %v195 = vpop.f32.mrf.mxu0
    %v196 = vadd.f32 0.0, %v195
    %197 = vmatmul.f32.gmra.mxu0 %v141
    %v198 = vpop.f32.mrf.mxu0
    %v199 = vadd.f32 0.0, %v198
    %200 = vmatmul.f32.gmra.mxu0 %v144
    %v201 = vpop.f32.mrf.mxu0
    %v202 = vadd.f32 0.0, %v201
    %203 = vmatmul.f32.gmra.mxu0 %v147
    %v204 = vpop.f32.mrf.mxu0
    %v205 = vadd.f32 0.0, %v204
    %206 = vdwg.mxu0
    %207 = vmatpush.msra.mxu0 0.0
    %208 = vmatpush.msra.mxu0 0.0
    %209 = vmatpush.msra.mxu0 0.0
    %210 = vmatpush.msra.mxu0 0.0
    %211 = vmatpush.msra.mxu0 0.0
    %212 = vmatpush.msra.mxu0 0.0
    %213 = vmatpush.msra.mxu0 0.0
    %214 = vmatpush.msra.mxu0 0.0
    %215 = vmatpush.msra.mxu0 0.0
    %216 = vmatpush.msra.mxu0 0.0
    %217 = vmatpush.msra.mxu0 0.0
    %218 = vmatpush.msra.mxu0 0.0
    %219 = vmatpush.msra.mxu0 %v135
    %220 = vmatpush.msra.mxu0 %v132
    %221 = vmatpush.msra.mxu0 %v129
    %222 = vmatpush.msra.mxu0 %v126
    %223 = vmatmul.f32.gmra.mxu0 %v138
    %v224 = vpop.f32.mrf.mxu0
    %v225 = vadd.f32 0.0, %v224
    %226 = vmatmul.f32.gmra.mxu0 %v141
    %v227 = vpop.f32.mrf.mxu0
    %v228 = vadd.f32 0.0, %v227
    %229 = vmatmul.f32.gmra.mxu0 %v144
    %v230 = vpop.f32.mrf.mxu0
    %v231 = vadd.f32 0.0, %v230
    %232 = vmatmul.f32.gmra.mxu0 %v147
    %v233 = vpop.f32.mrf.mxu0
    %v234 = vadd.f32 0.0, %v233
    %235 = vdwg.mxu0
    %v236 = vrot.slane %v196, 1
    %v237 = vrot.slane %v199, 1
    %v238 = vrot.slane %v202, 1
    %v239 = vrot.slane %v205, 1
    %vm240 = vcmp.lt.s32.totalorder %v33, 7
    %v241 = vsel %vm240, %v238, %v239
    %v242 = vsel %vm240, %v237, %v238
    %v243 = vsel %vm240, %v236, %v237
    %v244 = vsel %vm240, %v239, %v236
    %v245 = vadd.f32 %v167, %v243
    %v246 = vadd.f32 %v170, %v242
    %v247 = vadd.f32 %v173, %v241
    %v248 = vadd.f32 %v176, %v244
    %v249 = vrot.slane %v225, 2
    %v250 = vrot.slane %v228, 2
    %v251 = vrot.slane %v231, 2
    %v252 = vrot.slane %v234, 2
    %vm253 = vcmp.lt.s32.totalorder %v33, 6
    %v254 = vsel %vm253, %v251, %v252
    %v255 = vsel %vm253, %v250, %v251
    %v256 = vsel %vm253, %v249, %v250
    %v257 = vsel %vm253, %v252, %v249
    %v258 = vadd.f32 %v245, %v256
    %v259 = vadd.f32 %v246, %v255
    %v260 = vadd.f32 %v247, %v254
    %v261 = vadd.f32 %v248, %v257
    %v262 = vld [vmem:[#allocation2 + $0x60] sm:$0xff]
    %vm263 = vcmp.lt.s32.totalorder %v33, 30
    %vm264 = vcmp.lt.s32.totalorder %v34, 30
    %vm265 = vcmp.lt.s32.totalorder %v35, 30
    %vm266 = vcmp.lt.s32.totalorder %v36, 30
    %v267 = vperm.slane %v262, 0
    %v268 = vadd.f32 %v258, %v267
    %v269 = vadd.f32 %v259, %v267
    %v270 = vadd.f32 %v260, %v267
    %v271 = vadd.f32 %v261, %v267
    %v272 = vmax.f32 %v268, 0.0
    %v273 = vmax.f32 %v269, 0.0
    %v274 = vmax.f32 %v270, 0.0
    %v275 = vmax.f32 %v271, 0.0
    %v276 = vsel %vm263, %v272, 0.0
    %v277 = vsel %vm264, %v273, 0.0
    %v278 = vsel %vm265, %v274, 0.0
    %v279 = vsel %vm266, %v275, 0.0
    %v280 = vmax.f32 %v276, %v277
    %v281 = vmax.f32 %v278, %v279
    %v282 = vmax.f32 %v280, %v281
    %v283 = vrot.slane %v282, 4
    %v284 = vmax.f32 %v282, %v283
    %v285 = vrot.slane %v284, 2
    %v286 = vmax.f32 %v284, %v285
    %v287 = vrot.slane %v286, 1
    %v288 = vmax.f32 %v286, %v287
    %v289 = vld [vmem:[#allocation2 + $0x78] sm:$0xff]
    %v290 = vld [vmem:[#allocation2 + $0x90] sm:$0xff]
    %v291 = vld [vmem:[#allocation2 + $0xa8] sm:$0xff]
    %v292 = vld [vmem:[#allocation2 + $0xc0] sm:$0xff]
    %v293 = vld [vmem:[#allocation2 + $0xd8] sm:$0xff]
    %v294 = vld [vmem:[#allocation2 + $0xf0] sm:$0xff]
    %v295 = vld [vmem:[#allocation2 + $0x108] sm:$0xff]
    %v296 = vld [vmem:[#allocation2 + $0x120] sm:$0xff]
    %v297 = vld [vmem:[#allocation2 + $0x138] sm:$0xff]
    %v298 = vld [vmem:[#allocation2 + $0x150] sm:$0xff]
    %v299 = vld [vmem:[#allocation2 + $0x168] sm:$0xff]
    %v300 = vld [vmem:[#allocation2 + $0x180] sm:$0xff]
    %v301 = vld [vmem:[#allocation2 + $0x198] sm:$0xff]
    %v302 = vld [vmem:[#allocation2 + $0x1b0] sm:$0xff]
    %v303 = vld [vmem:[#allocation2 + $0x1c8] sm:$0xff]
    %v304 = vld [vmem:[#allocation2 + $0x1e0] sm:$0xff]
    %v306 = vrot.slane %v262, 1
    %308 = vmatpush.msra.mxu0 %v304
    %309 = vmatpush.msra.mxu0 %v303
    %310 = vmatpush.msra.mxu0 %v302
    %311 = vmatpush.msra.mxu0 %v301
    %312 = vmatpush.msra.mxu0 %v300
    %313 = vmatpush.msra.mxu0 %v299
    %314 = vmatpush.msra.mxu0 %v298
    %315 = vmatpush.msra.mxu0 %v297
    %316 = vmatpush.msra.mxu0 %v296
    %317 = vmatpush.msra.mxu0 %v295
    %318 = vmatpush.msra.mxu0 %v294
    %319 = vmatpush.msra.mxu0 %v293
    %320 = vmatpush.msra.mxu0 %v292
    %321 = vmatpush.msra.mxu0 %v291
    %322 = vmatpush.msra.mxu0 %v290
    %323 = vmatpush.msra.mxu0 %v289
    %324 = vmatmul.f32.gmra.mxu0 %v288
    %v325 = vpop.f32.mrf.mxu0
    %v326 = vadd.f32 %v306, %v325
    %327 = vdwg.mxu0
    %328 = vst [vmem:[%s3] sm:$0x1] %v326
    %s329 = scalar_lea.vmem %s0, 32
    %v330 = vld [vmem:[%s329] sm:$0xff]
    %v331 = vld [vmem:[%s329 + $0x8] sm:$0xff]
    %v332 = vld [vmem:[%s329 + $0x10] sm:$0xff]
    %v333 = vld [vmem:[%s329 + $0x18] sm:$0xff]
    %334 = vset.pattern.permute.xlu0 0
    %335 = vperm.xlu0 %334, %v330
    %v336 = vpop.permute.xlu0 %335
    %337 = vset.pattern.permute.xlu0 0
    %338 = vperm.xlu0 %337, %v331
    %v339 = vpop.permute.xlu0 %338
    %340 = vset.pattern.permute.xlu0 0
    %341 = vperm.xlu0 %340, %v332
    %v342 = vpop.permute.xlu0 %341
    %343 = vset.pattern.permute.xlu0 0
    %344 = vperm.xlu0 %343, %v333
    %v345 = vpop.permute.xlu0 %344
    %vm346 = vcmp.eq.s32.totalorder %v336, %v31
    %vm347 = vcmp.eq.s32.totalorder %v339, %v31
    %vm348 = vcmp.eq.s32.totalorder %v342, %v31
    %vm349 = vcmp.eq.s32.totalorder %v345, %v31
    %v350 = vsel %vm346, 1, 0
    %v351 = vsel %vm347, 1, 0
    %v352 = vsel %vm348, 1, 0
    %v353 = vsel %vm349, 1, 0
    %v354 = vcvt.s32.f32 %v350
    %v355 = vcvt.s32.f32 %v351
    %v356 = vcvt.s32.f32 %v352
    %v357 = vcvt.s32.f32 %v353
    %s358 = scalar_lea.vmem %s1, 104
    %v359 = vld [vmem:[%s358] sm:$0xff]
    %v360 = vld [vmem:[%s358 + $0x8] sm:$0xff]
    %v361 = vld [vmem:[%s358 + $0x10] sm:$0xff]
    %v362 = vld [vmem:[%s358 + $0x18] sm:$0xff]
    %v363 = vld [vmem:[%s358 + $0x20] sm:$0xff]
    %v364 = vld [vmem:[%s358 + $0x28] sm:$0xff]
    %v365 = vld [vmem:[%s358 + $0x30] sm:$0xff]
    %v366 = vld [vmem:[%s358 + $0x38] sm:$0xff]
    %v367 = vld [vmem:[%s358 + $0x40] sm:$0xff]
    %v368 = vld [vmem:[%s358 + $0x48] sm:$0xff]
    %v369 = vld [vmem:[%s358 + $0x50] sm:$0xff]
    %v370 = vld [vmem:[%s358 + $0x58] sm:$0xff]
    %v371 = vld [vmem:[%s358 + $0x60] sm:$0xf]
    %v373 = vsel %vm78, %v354, 0
    %v376 = vsel %vm78, %v355, 0
    %v379 = vsel %vm78, %v356, 0
    %v382 = vsel %vm78, %v357, 0
    %v385 = vsel %vm91, %v371, 0
    %387 = vmatpush.msra.mxu0 0.0
    %388 = vmatpush.msra.mxu0 0.0
    %389 = vmatpush.msra.mxu0 0.0
    %390 = vmatpush.msra.mxu0 %v385
    %391 = vmatpush.msra.mxu0 %v370
    %392 = vmatpush.msra.mxu0 %v369
    %393 = vmatpush.msra.mxu0 %v368
    %394 = vmatpush.msra.mxu0 %v367
    %395 = vmatpush.msra.mxu0 %v366
    %396 = vmatpush.msra.mxu0 %v365
    %397 = vmatpush.msra.mxu0 %v364
    %398 = vmatpush.msra.mxu0 %v363
    %399 = vmatpush.msra.mxu0 %v362
    %400 = vmatpush.msra.mxu0 %v361
    %401 = vmatpush.msra.mxu0 %v360
    %402 = vmatpush.msra.mxu0 %v359
    %403 = vmatmul.f32.gmra.mxu0 %v373
    %v404 = vpop.f32.mrf.mxu0
    %v405 = vadd.f32 0.0, %v404
    %406 = vmatmul.f32.gmra.mxu0 %v376
    %v407 = vpop.f32.mrf.mxu0
    %v408 = vadd.f32 0.0, %v407
    %409 = vmatmul.f32.gmra.mxu0 %v379
    %v410 = vpop.f32.mrf.mxu0
    %v411 = vadd.f32 0.0, %v410
    %412 = vmatmul.f32.gmra.mxu0 %v382
    %v413 = vpop.f32.mrf.mxu0
    %v414 = vadd.f32 0.0, %v413
    %415 = vdwg.mxu0
    %s416 = scalar_lea.vmem [#allocation2], 504
    %v417 = vld [vmem:[%s416] sm:$0xff]
    %v418 = vld [vmem:[%s416 + $0x8] sm:$0xff]
    %v419 = vld [vmem:[%s416 + $0x10] sm:$0xff]
    %v420 = vld [vmem:[%s416 + $0x18] sm:$0xff]
    %v421 = vld [vmem:[%s416 + $0x20] sm:$0xff]
    %v422 = vld [vmem:[%s416 + $0x28] sm:$0xff]
    %v423 = vld [vmem:[%s416 + $0x30] sm:$0xff]
    %v424 = vld [vmem:[%s416 + $0x38] sm:$0xff]
    %v425 = vld [vmem:[%s416 + $0x40] sm:$0xff]
    %v426 = vld [vmem:[%s416 + $0x48] sm:$0xff]
    %v427 = vld [vmem:[%s416 + $0x50] sm:$0xff]
    %v428 = vld [vmem:[%s416 + $0x58] sm:$0xff]
    %v430 = vsel %vm136, %v405, 0
    %v433 = vsel %vm136, %v408, 0
    %v436 = vsel %vm136, %v411, 0
    %v439 = vsel %vm136, %v414, 0
    %441 = vmatpush.msra.mxu0 0.0
    %442 = vmatpush.msra.mxu0 0.0
    %443 = vmatpush.msra.mxu0 0.0
    %444 = vmatpush.msra.mxu0 0.0
    %445 = vmatpush.msra.mxu0 0.0
    %446 = vmatpush.msra.mxu0 0.0
    %447 = vmatpush.msra.mxu0 0.0
    %448 = vmatpush.msra.mxu0 0.0
    %449 = vmatpush.msra.mxu0 0.0
    %450 = vmatpush.msra.mxu0 0.0
    %451 = vmatpush.msra.mxu0 0.0
    %452 = vmatpush.msra.mxu0 0.0
    %453 = vmatpush.msra.mxu0 %v426
    %454 = vmatpush.msra.mxu0 %v423
    %455 = vmatpush.msra.mxu0 %v420
    %456 = vmatpush.msra.mxu0 %v417
    %457 = vmatmul.f32.gmra.mxu0 %v430
    %v458 = vpop.f32.mrf.mxu0
    %v459 = vadd.f32 0.0, %v458
    %460 = vmatmul.f32.gmra.mxu0 %v433
    %v461 = vpop.f32.mrf.mxu0
    %v462 = vadd.f32 0.0, %v461
    %463 = vmatmul.f32.gmra.mxu0 %v436
    %v464 = vpop.f32.mrf.mxu0
    %v465 = vadd.f32 0.0, %v464
    %466 = vmatmul.f32.gmra.mxu0 %v439
    %v467 = vpop.f32.mrf.mxu0
    %v468 = vadd.f32 0.0, %v467
    %469 = vdwg.mxu0
    %470 = vmatpush.msra.mxu0 0.0
    %471 = vmatpush.msra.mxu0 0.0
    %472 = vmatpush.msra.mxu0 0.0
    %473 = vmatpush.msra.mxu0 0.0
    %474 = vmatpush.msra.mxu0 0.0
    %475 = vmatpush.msra.mxu0 0.0
    %476 = vmatpush.msra.mxu0 0.0
    %477 = vmatpush.msra.mxu0 0.0
    %478 = vmatpush.msra.mxu0 0.0
    %479 = vmatpush.msra.mxu0 0.0
    %480 = vmatpush.msra.mxu0 0.0
    %481 = vmatpush.msra.mxu0 0.0
    %482 = vmatpush.msra.mxu0 %v427
    %483 = vmatpush.msra.mxu0 %v424
    %484 = vmatpush.msra.mxu0 %v421
    %485 = vmatpush.msra.mxu0 %v418
    %486 = vmatmul.f32.gmra.mxu0 %v430
    %v487 = vpop.f32.mrf.mxu0
    %v488 = vadd.f32 0.0, %v487
    %489 = vmatmul.f32.gmra.mxu0 %v433
    %v490 = vpop.f32.mrf.mxu0
    %v491 = vadd.f32 0.0, %v490
    %492 = vmatmul.f32.gmra.mxu0 %v436
    %v493 = vpop.f32.mrf.mxu0
    %v494 = vadd.f32 0.0, %v493
    %495 = vmatmul.f32.gmra.mxu0 %v439
    %v496 = vpop.f32.mrf.mxu0
    %v497 = vadd.f32 0.0, %v496
    %498 = vdwg.mxu0
    %499 = vmatpush.msra.mxu0 0.0
    %500 = vmatpush.msra.mxu0 0.0
    %501 = vmatpush.msra.mxu0 0.0
    %502 = vmatpush.msra.mxu0 0.0
    %503 = vmatpush.msra.mxu0 0.0
    %504 = vmatpush.msra.mxu0 0.0
    %505 = vmatpush.msra.mxu0 0.0
    %506 = vmatpush.msra.mxu0 0.0
    %507 = vmatpush.msra.mxu0 0.0
    %508 = vmatpush.msra.mxu0 0.0
    %509 = vmatpush.msra.mxu0 0.0
    %510 = vmatpush.msra.mxu0 0.0
    %511 = vmatpush.msra.mxu0 %v428
    %512 = vmatpush.msra.mxu0 %v425
    %513 = vmatpush.msra.mxu0 %v422
    %514 = vmatpush.msra.mxu0 %v419
    %515 = vmatmul.f32.gmra.mxu0 %v430
    %v516 = vpop.f32.mrf.mxu0
    %v517 = vadd.f32 0.0, %v516
    %518 = vmatmul.f32.gmra.mxu0 %v433
    %v519 = vpop.f32.mrf.mxu0
    %v520 = vadd.f32 0.0, %v519
    %521 = vmatmul.f32.gmra.mxu0 %v436
    %v522 = vpop.f32.mrf.mxu0
    %v523 = vadd.f32 0.0, %v522
    %524 = vmatmul.f32.gmra.mxu0 %v439
    %v525 = vpop.f32.mrf.mxu0
    %v526 = vadd.f32 0.0, %v525
    %527 = vdwg.mxu0
    %v528 = vrot.slane %v488, 1
    %v529 = vrot.slane %v491, 1
    %v530 = vrot.slane %v494, 1
    %v531 = vrot.slane %v497, 1
    %v532 = vsel %vm240, %v530, %v531
    %v533 = vsel %vm240, %v529, %v530
    %v534 = vsel %vm240, %v528, %v529
    %v535 = vsel %vm240, %v531, %v528
    %v536 = vadd.f32 %v459, %v534
    %v537 = vadd.f32 %v462, %v533
    %v538 = vadd.f32 %v465, %v532
    %v539 = vadd.f32 %v468, %v535
    %v540 = vrot.slane %v517, 2
    %v541 = vrot.slane %v520, 2
    %v542 = vrot.slane %v523, 2
    %v543 = vrot.slane %v526, 2
    %v544 = vsel %vm253, %v542, %v543
    %v545 = vsel %vm253, %v541, %v542
    %v546 = vsel %vm253, %v540, %v541
    %v547 = vsel %vm253, %v543, %v540
    %v548 = vadd.f32 %v536, %v546
    %v549 = vadd.f32 %v537, %v545
    %v550 = vadd.f32 %v538, %v544
    %v551 = vadd.f32 %v539, %v547
    %v552 = vld [vmem:[%s416 + $0x60] sm:$0xff]
    %v553 = vperm.slane %v552, 0
    %v554 = vadd.f32 %v548, %v553
    %v555 = vadd.f32 %v549, %v553
    %v556 = vadd.f32 %v550, %v553
    %v557 = vadd.f32 %v551, %v553
    %v558 = vmax.f32 %v554, 0.0
    %v559 = vmax.f32 %v555, 0.0
    %v560 = vmax.f32 %v556, 0.0
    %v561 = vmax.f32 %v557, 0.0
    %v562 = vsel %vm263, %v558, 0.0
    %v563 = vsel %vm264, %v559, 0.0
    %v564 = vsel %vm265, %v560, 0.0
    %v565 = vsel %vm266, %v561, 0.0
    %v566 = vmax.f32 %v562, %v563
    %v567 = vmax.f32 %v564, %v565
    %v568 = vmax.f32 %v566, %v567
    %v569 = vrot.slane %v568, 4
    %v570 = vmax.f32 %v568, %v569
    %v571 = vrot.slane %v570, 2
    %v572 = vmax.f32 %v570, %v571
    %v573 = vrot.slane %v572, 1
    %v574 = vmax.f32 %v572, %v573
    %v575 = vld [vmem:[%s416 + $0x78] sm:$0xff]
    %v576 = vld [vmem:[%s416 + $0x90] sm:$0xff]
    %v577 = vld [vmem:[%s416 + $0xa8] sm:$0xff]
    %v578 = vld [vmem:[%s416 + $0xc0] sm:$0xff]
    %v579 = vld [vmem:[%s416 + $0xd8] sm:$0xff]
    %v580 = vld [vmem:[%s416 + $0xf0] sm:$0xff]
    %v581 = vld [vmem:[%s416 + $0x108] sm:$0xff]
    %v582 = vld [vmem:[%s416 + $0x120] sm:$0xff]
    %v583 = vld [vmem:[%s416 + $0x138] sm:$0xff]
    %v584 = vld [vmem:[%s416 + $0x150] sm:$0xff]
    %v585 = vld [vmem:[%s416 + $0x168] sm:$0xff]
    %v586 = vld [vmem:[%s416 + $0x180] sm:$0xff]
    %v587 = vld [vmem:[%s416 + $0x198] sm:$0xff]
    %v588 = vld [vmem:[%s416 + $0x1b0] sm:$0xff]
    %v589 = vld [vmem:[%s416 + $0x1c8] sm:$0xff]
    %v590 = vld [vmem:[%s416 + $0x1e0] sm:$0xff]
    %v592 = vrot.slane %v552, 1
    %594 = vmatpush.msra.mxu0 %v590
    %595 = vmatpush.msra.mxu0 %v589
    %596 = vmatpush.msra.mxu0 %v588
    %597 = vmatpush.msra.mxu0 %v587
    %598 = vmatpush.msra.mxu0 %v586
    %599 = vmatpush.msra.mxu0 %v585
    %600 = vmatpush.msra.mxu0 %v584
    %601 = vmatpush.msra.mxu0 %v583
    %602 = vmatpush.msra.mxu0 %v582
    %603 = vmatpush.msra.mxu0 %v581
    %604 = vmatpush.msra.mxu0 %v580
    %605 = vmatpush.msra.mxu0 %v579
    %606 = vmatpush.msra.mxu0 %v578
    %607 = vmatpush.msra.mxu0 %v577
    %608 = vmatpush.msra.mxu0 %v576
    %609 = vmatpush.msra.mxu0 %v575
    %610 = vmatmul.f32.gmra.mxu0 %v574
    %v611 = vpop.f32.mrf.mxu0
    %v612 = vadd.f32 %v592, %v611
    %613 = vdwg.mxu0
    %s614 = scalar_lea.vmem %s3, 1
    %615 = vst [vmem:[%s614] sm:$0x1] %v612
    // Predicated region
    $region18: #{deepconn_forward.1} parent=1 // pred_check
      _
    $region19: #{deepconn_forward.1} parent=1 // pred_check_branch
      %617 = sbr.rel (0) target = $region21
    $region20: #{deepconn_forward.1} parent=1 // pred_region
      _
    $region21: #{deepconn_forward.1} parent=1 // pred_fallthru
      _
    // Predicated region
    $region22: #{deepconn_forward.1} parent=1 // pred_check
      _
    $region23: #{deepconn_forward.1} parent=1 // pred_check_branch
      %619 = sbr.rel (0) target = $region25
    $region24: #{deepconn_forward.1} parent=1 // pred_region
      _
    $region25: #{deepconn_forward.1} parent=1 // pred_fallthru
      _
    %620 = vsyncpa [#allocation3], 1

</llo_original>
